<compile_context>
chip_gen: v7x
topology: tpu7x:2x2x1
jax: 0.10.0
libtpu: 0.0.40
codegen_flags: <defaults>
</compile_context>

<pallas_src>
import math
import numpy as np
import jax
import jax.numpy as jnp
from jax.experimental import pallas as pl
from jax.experimental.pallas import tpu as pltpu

_BN_EPS = 1e-5


# ---------------------------------------------------------------------------
# Fused Pallas kernel: conv(matmul) + folded BN + ReLU + MaxPool2d(4,4)
# ---------------------------------------------------------------------------

def _fused_conv_bn_relu_pool_kernel(p_ref, w_ref, b_ref, o_ref):
    """One grid step = one full sample.

    p_ref: (1, Gp*16, Kp) bf16  im2col patches regrouped so each 4x4 pooling
                                window is 16 contiguous rows; rows padded to
                                Gp*16 (Gp multiple of 8) and K padded to
                                Kp=128 with zeros.
    w_ref: (Kp, Fp)       bf16  conv weight with BN scale folded, zero-padded
                                to (128, 128) — lane-dense MXU RHS.
    b_ref: (1, Fp)        f32   fused bias: (conv_b - running_mean)*scale + beta.
    o_ref: (1, Gp, Fp)    bf16  max-pooled, post-ReLU activations (dense store).
    """
    fp = w_ref.shape[1]
    groups = o_ref.shape[1]                       # static: Gp (multiple of 8)
    acc = jnp.dot(p_ref[0], w_ref[...], preferred_element_type=jnp.float32)
    y = jnp.maximum(acc + b_ref[...], 0.0)        # BN + ReLU epilogue in f32
    # Fused MaxPool2d(4,4): each contiguous group of 16 rows (= 2 full sublane
    # tiles, so the reshape stays a view) is one pooling window.
    o_ref[0] = jnp.max(y.reshape(groups, 16, fp), axis=1).astype(o_ref.dtype)


def fused_conv_bn_relu_pool(patches, w_pad, b_pad, groups_pad):
    n, rows, kp = patches.shape
    fp = w_pad.shape[1]
    return pl.pallas_call(
        _fused_conv_bn_relu_pool_kernel,
        out_shape=jax.ShapeDtypeStruct((n, groups_pad, fp), jnp.bfloat16),
        grid=(n,),
        in_specs=[
            pl.BlockSpec((1, rows, kp), lambda i: (i, 0, 0)),   # per-sample patches
            pl.BlockSpec((kp, fp), lambda i: (0, 0)),           # resident weight
            pl.BlockSpec((1, fp), lambda i: (0, 0)),            # resident bias
        ],
        out_specs=pl.BlockSpec((1, groups_pad, fp), lambda i: (i, 0, 0)),
        compiler_params=pltpu.CompilerParams(
            dimension_semantics=("parallel",)),      # v7x: one sample per TC
    )(patches, w_pad, b_pad)


# ---------------------------------------------------------------------------
# Forward pass (glue = layout plumbing + tiny epilogue; hot path = fused kernel)
# ---------------------------------------------------------------------------

def _adaptive_avg_pool_nhwc(x, out_h, out_w):
    """PyTorch AdaptiveAvgPool2d bin semantics on NHWC (tiny; XLA glue)."""
    _, Hi, Wi, _ = x.shape
    rows = []
    for i in range(out_h):
        h0 = (i * Hi) // out_h
        h1 = -(-((i + 1) * Hi) // out_h)        # ceil
        cols = []
        for j in range(out_w):
            w0 = (j * Wi) // out_w
            w1 = -(-((j + 1) * Wi) // out_w)
            cols.append(jnp.mean(x[:, h0:h1, w0:w1, :], axis=(1, 2)))
        rows.append(jnp.stack(cols, axis=1))
    return jnp.stack(rows, axis=1)              # (N, out_h, out_w, C)


def recnet_v2_forward(x, params):
    """x: (N, Cin, H, W) float32 (NCHW, as in PyTorch)."""
    conv_w, conv_b = params["conv_w"], params["conv_b"]        # (F,Cin,5,5),(F,)
    gamma, beta = params["bn_gamma"], params["bn_beta"]        # (F,), (F,)
    mean, var = params["bn_mean"], params["bn_var"]            # (F,), (F,)
    lin_w, lin_b = params["lin_w"], params["lin_b"]            # (C,25F), (C,)

    N, Cin, H, W = x.shape
    F = conv_w.shape[0]
    K = 25 * Cin
    Hout, Wout = H - 4, W - 4
    PH, PW = Hout // 4, Wout // 4                              # floor (MaxPool trunc)
    groups = PH * PW                                           # pool windows / sample

    # Padded sizes: lane-dense K and F, sublane-dense pooled-row count.
    Kp = ((K + 127) // 128) * 128
    Fp = ((F + 127) // 128) * 128
    groups_pad = ((groups + 7) // 8) * 8
    rows_pad = groups_pad * 16

    # --- im2col + 4x4 pooling-window regroup (XLA glue; negligible here) ---
    # TODO(synk): at large H/W replace this with in-kernel im2col via halo
    # BlockSpecs (see header note) to avoid the 25x HBM expansion.
    x_nhwc = jnp.transpose(x, (0, 2, 3, 1))
    pats = [x_nhwc[:, kh:kh + Hout, kw:kw + Wout, :]
            for kh in range(5) for kw in range(5)]
    patches = jnp.stack(pats, axis=3).reshape(N, Hout, Wout, K)
    patches = patches[:, :PH * 4, :PW * 4, :].reshape(N, PH, 4, PW, 4, K)
    patches = jnp.transpose(patches, (0, 1, 3, 2, 4, 5))       # (N,PH,PW,4,4,K)
    patches = patches.reshape(N, groups * 16, K)
    # zero-pad rows -> rows_pad (sublane-dense groups) and K -> Kp (lane-dense)
    patches_p = jnp.zeros((N, rows_pad, Kp), jnp.bfloat16)
    patches_p = patches_p.at[:, :groups * 16, :K].set(patches.astype(jnp.bfloat16))

    # --- fold BN (eval) into conv weight/bias; pad to (Kp, Fp) ---
    scale = gamma / jnp.sqrt(var + _BN_EPS)                    # (F,)
    wmat = jnp.transpose(conv_w, (2, 3, 1, 0)).reshape(K, F)   # (kh,kw,cin) order
    w_folded = (wmat * scale[None, :]).astype(jnp.bfloat16)
    b_folded = ((conv_b - mean) * scale + beta).astype(jnp.float32)
    w_pad = jnp.zeros((Kp, Fp), jnp.bfloat16).at[:K, :F].set(w_folded)
    b_pad = jnp.zeros((1, Fp), jnp.float32).at[0, :F].set(b_folded)

    # --- fused Pallas kernel: conv + BN + ReLU + MaxPool2d(4,4) ---
    pooled = fused_conv_bn_relu_pool(patches_p, w_pad, b_pad, groups_pad)
    pooled = pooled[:, :groups, :F].astype(jnp.float32).reshape(N, PH, PW, F)

    # Dropout: identity in eval mode.
    # --- tiny tail left to XLA (a Pallas call here is pure launch overhead) ---
    ap = _adaptive_avg_pool_nhwc(pooled, 5, 5)                    # (N,5,5,F)
    flat = jnp.transpose(ap, (0, 3, 1, 2)).reshape(N, F * 25)     # NCHW flatten
    return flat @ lin_w.T + lin_b


# ---------------------------------------------------------------------------
# Pure-JAX f32 reference (for correctness check)
# ---------------------------------------------------------------------------

def recnet_v2_reference(x, params):
    conv = jax.lax.conv_general_dilated(
        x, params["conv_w"], (1, 1), "VALID",
        dimension_numbers=("NCHW", "OIHW", "NCHW"))
    conv = conv + params["conv_b"][None, :, None, None]
    scale = params["bn_gamma"] / jnp.sqrt(params["bn_var"] + _BN_EPS)
    bn = (conv - params["bn_mean"][None, :, None, None]) \
        * scale[None, :, None, None] + params["bn_beta"][None, :, None, None]
    r = jnp.maximum(bn, 0.0)
    mp = jax.lax.reduce_window(r, -jnp.inf, jax.lax.max,
                               (1, 1, 4, 4), (1, 1, 4, 4), "VALID")
    ap = _adaptive_avg_pool_nhwc(jnp.transpose(mp, (0, 2, 3, 1)), 5, 5)
    flat = jnp.transpose(ap, (0, 3, 1, 2)).reshape(x.shape[0], -1)
    return flat @ params["lin_w"].T + params["lin_b"]


# ---------------------------------------------------------------------------
# Main
# ---------------------------------------------------------------------------

if __name__ == "__main__":
    # small shapes consistent with the module:
    # conv 24x24 -> 20x20, maxpool(4,4) -> 5x5, adaptive avgpool -> 5x5
    N, Cin, H, W = 2, 4, 24, 24
    FEAT, NUM_CLASSES = 8, 10

    key = jax.random.PRNGKey(0)
    k1, k2, k3, kx = jax.random.split(key, 4)

    # deterministic parameter init (shapes per __init__; values synthetic)
    conv_w = jax.random.normal(k1, (FEAT, Cin, 5, 5), jnp.float32) \
        * math.sqrt(2.0 / (FEAT * 5 * 5))                       # kaiming fan_out
    conv_b = jax.random.uniform(k2, (FEAT,), jnp.float32, -0.1, 0.1)
    lin_w = jax.random.normal(k3, (NUM_CLASSES, 25 * FEAT), jnp.float32) * 0.01
    lin_b = jnp.zeros((NUM_CLASSES,), jnp.float32)
    params = {
        "conv_w": conv_w, "conv_b": conv_b,
        "bn_gamma": jnp.ones((FEAT,), jnp.float32),
        "bn_beta": jnp.zeros((FEAT,), jnp.float32),
        "bn_mean": jnp.zeros((FEAT,), jnp.float32),
        "bn_var": jnp.ones((FEAT,), jnp.float32),
        "lin_w": lin_w, "lin_b": lin_b,
    }

    x = jax.random.normal(kx, (N, Cin, H, W), jnp.float32)

    fwd = jax.jit(recnet_v2_forward)
    out = jax.block_until_ready(fwd(x, params))
    ref = jax.block_until_ready(recnet_v2_reference(x, params))

    assert out.shape == (N, NUM_CLASSES), out.shape
    # bf16 MXU operands + bf16 pooled store -> compare vs f32 ref at bf16 tol.
    assert np.allclose(np.asarray(out), np.asarray(ref), rtol=2e-2, atol=2e-2), \
        "Pallas output mismatch vs reference"
    print("KERNEL_OK")
</pallas_src>

<mosaic_0001>
module attributes {stable_mosaic.version = 11 : i64} {
  func.func @_fused_conv_bn_relu_pool_kernel(%arg0: i32, %arg1: memref<1x512x128xbf16, #tpu.memory_space<vmem>>, %arg2: memref<128x128xbf16, #tpu.memory_space<vmem>>, %arg3: memref<1x128xf32, #tpu.memory_space<vmem>>, %arg4: memref<1x32x128xbf16, #tpu.memory_space<vmem>>) attributes {dimension_semantics = [#tpu.dimension_semantics<parallel>], iteration_bounds = array<i64: 2>, scalar_prefetch = 0 : i64, scratch_operands = 0 : i64, tpu.core_type = #tpu.core_type<tc>, window_params = [{transform_indices = @transform_0, window_bounds = array<i64: 1, 512, 128>}, {pipeline_mode = #tpu.pipeline_mode<synchronous>, transform_indices = @transform_1, window_bounds = array<i64: 128, 128>}, {pipeline_mode = #tpu.pipeline_mode<synchronous>, transform_indices = @transform_2, window_bounds = array<i64: 1, 128>}, {transform_indices = @transform_3, window_bounds = array<i64: 1, 32, 128>}]} {
    %c0 = arith.constant 0 : index
    %c0_0 = arith.constant 0 : index
    %c0_1 = arith.constant 0 : index
    %0 = vector.load %arg1[%c0, %c0_0, %c0_1] : memref<1x512x128xbf16, #tpu.memory_space<vmem>>, vector<1x512x128xbf16>
    %1 = vector.shape_cast %0 : vector<1x512x128xbf16> to vector<512x128xbf16>
    %c0_2 = arith.constant 0 : index
    %c0_3 = arith.constant 0 : index
    %2 = vector.load %arg2[%c0_2, %c0_3] : memref<128x128xbf16, #tpu.memory_space<vmem>>, vector<128x128xbf16>
    %cst = arith.constant dense<0.000000e+00> : vector<512x128xf32>
    %3 = tpu.matmul %1, %2, %cst {dimension_numbers = #tpu.dot_dimension_numbers<[1], [0], [0], [1], [0, 0, 1, 1], [], []>} : vector<512x128xbf16>, vector<128x128xbf16>, vector<512x128xf32> -> vector<512x128xf32>
    %c0_4 = arith.constant 0 : index
    %c0_5 = arith.constant 0 : index
    %4 = vector.load %arg3[%c0_4, %c0_5] : memref<1x128xf32, #tpu.memory_space<vmem>>, vector<1x128xf32>
    %5 = vector.broadcast %4 : vector<1x128xf32> to vector<512x128xf32>
    %6 = arith.addf %3, %5 : vector<512x128xf32>
    %cst_6 = arith.constant 0.000000e+00 : f32
    %7 = vector.broadcast %cst_6 : f32 to vector<512x128xf32>
    %8 = arith.maximumf %6, %7 : vector<512x128xf32>
    %9 = vector.shape_cast %8 : vector<512x128xf32> to vector<32x16x128xf32>
    %cst_7 = arith.constant dense<0xFF800000> : vector<32x128xf32>
    %10 = vector.multi_reduction <maximumf>, %9, %cst_7 [1] : vector<32x16x128xf32> to vector<32x128xf32>
    %11 = arith.truncf %10 : vector<32x128xf32> to vector<32x128xbf16>
    %c0_8 = arith.constant 0 : index
    %c0_9 = arith.constant 0 : index
    %c0_10 = arith.constant 0 : index
    %12 = vector.load %arg4[%c0_8, %c0_9, %c0_10] : memref<1x32x128xbf16, #tpu.memory_space<vmem>>, vector<1x32x128xbf16>
    %13 = vector.shape_cast %12 : vector<1x32x128xbf16> to vector<32x128xbf16>
    %14 = vector.shape_cast %11 : vector<32x128xbf16> to vector<1x32x128xbf16>
    tpu.vector_store %arg4[%c0_8, %c0_9, %c0_10], %14 {strides = array<i32>} : memref<1x32x128xbf16, #tpu.memory_space<vmem>>, vector<1x32x128xbf16>,
    return
  }
  func.func @transform_0(%arg0: i32) -> (i32, i32, i32) {
    %c0_i32 = arith.constant 0 : i32
    %c0_i32_0 = arith.constant 0 : i32
    %c0_i32_1 = arith.constant 0 : i32
    return %arg0, %c0_i32, %c0_i32_0 : i32, i32, i32
  }
  func.func @transform_1(%arg0: i32) -> (i32, i32) {
    %c0_i32 = arith.constant 0 : i32
    %c0_i32_0 = arith.constant 0 : i32
    %c0_i32_1 = arith.constant 0 : i32
    return %c0_i32, %c0_i32_0 : i32, i32
  }
  func.func @transform_2(%arg0: i32) -> (i32, i32) {
    %c0_i32 = arith.constant 0 : i32
    %c0_i32_0 = arith.constant 0 : i32
    %c0_i32_1 = arith.constant 0 : i32
    return %c0_i32, %c0_i32_0 : i32, i32
  }
  func.func @transform_3(%arg0: i32) -> (i32, i32, i32) {
    %c0_i32 = arith.constant 0 : i32
    %c0_i32_0 = arith.constant 0 : i32
    %c0_i32_1 = arith.constant 0 : i32
    return %arg0, %c0_i32, %c0_i32_0 : i32, i32, i32
  }
}

</mosaic_0001>

<llo_original>
// kernel: recnet_v2_forward.1
$region0: #{recnet_v2_forward.1}
  #allocation0 [shape = 'u32[]', space=smem, size = 0x4, offset = 0x4, fixed_abs, tag = 'smem constant byte address 0x4 - core index']
  #allocation1 [shape = 'u32[144,128]{1,0:T(1,128)}', space=vmem, size = 0x12000, scoped, tag = 'internal scratch']
  %s0 = inlined_call_operand.vmem [shape: bf16[2,512,128], index: 0, kind: input, shape index: {}]
  %s1 = inlined_call_operand.vmem [shape: bf16[128,128], index: 1, kind: input, shape index: {}]
  %s2 = inlined_call_operand.vmem [shape: f32[1,128], index: 2, kind: input, shape index: {}]
  %s3 = inlined_call_operand.vmem [shape: bf16[2,32,128], index: 3, kind: output, shape index: {}]
  %s4 = sld [smem:[#allocation0]]
  $region45: #{recnet_v2_forward.1} parent=0
    _
  %s6 = ssub.s32 1, %s4
  %s7 = scalar_select 0, %s6, %s4
  loop: start=0, step=1, limit=4
  $region2: #{recnet_v2_forward.1} parent=0 // loop_pre_header
    _
  $region3: #{recnet_v2_forward.1} parent=0 // loop_header
    %s9 = sphi 0, %s13
    %p10 = scmp.ge.s32.totalorder %s9, 4
    %s19 = sphi 0, %s21
    %s22 = sphi 0, %s19
    %s23 = sphi 0, %s22
    %s39 = sphi 0, %s23
    %s43 = sphi 0, %s43
    %s45 = sphi 0, %s43
    %s46 = sphi 0, %s45
    %s60 = sphi 0, %s46
    %s64 = sphi 0, %s64
    %s66 = sphi 0, %s64
    %s67 = sphi 0, %s66
    %s81 = sphi 0, %s67
    %s87 = sphi 0, %s89
    %s90 = sphi 0, %s87
    %s91 = sphi 0, %s90
    %s107 = sphi 0, %s91
  $region4: #{recnet_v2_forward.1} parent=0 // loop_header_branch
    %12 = sbr.rel (%p10) target = $region8
  $region5: #{recnet_v2_forward.1} parent=0 // loop_body
    %s14 = ssub.s32 %s9, 1
    %s15 = ssub.s32 %s9, 2
    %s16 = sadd.s32 %s9, 1
    %s17 = ssub.s32 %s9, %s16
    %p18 = scmp.eq.s32.totalorder %s17, 0
    %s20 = sadd.s32 %s19, 1
    %s21 = scalar_select %p18, %s19, %s20
    %p24 = pneg %p18
    %p25 = scmp.eq.s32.totalorder %s9, 1
    %p26 = por %p24, %p25
    %p27 = scmp.ne.s32.totalorder %s19, %s22
    %p28 = scmp.eq.s32.totalorder %s9, 0
    %p29 = por %p27, %p28
    %p30 = scmp.ne.s32.totalorder %s19, %s22
    %p31 = scmp.eq.s32.totalorder %s14, 1
    %p32 = por %p30, %p31
    %p33 = scmp.ne.s32.totalorder %s22, %s23
    %p34 = scmp.eq.s32.totalorder %s14, 0
    %p35 = por %p33, %p34
    %p36 = scmp.ne.s32.totalorder %s22, %s23
    %p37 = scmp.eq.s32.totalorder %s15, 1
    %p38 = por %p36, %p37
    %p40 = scmp.ne.s32.totalorder %s23, %s39
    %p41 = scmp.eq.s32.totalorder %s15, 0
    %p42 = por %p40, %p41
    %s44 = sadd.s32 %s43, 1
    %p47 = scmp.eq.s32.totalorder %s9, 1
    %p48 = scmp.ne.s32.totalorder %s43, %s45
    %p49 = scmp.eq.s32.totalorder %s9, 0
    %p50 = por %p48, %p49
    %p51 = scmp.ne.s32.totalorder %s43, %s45
    %p52 = scmp.eq.s32.totalorder %s14, 1
    %p53 = por %p51, %p52
    %p54 = scmp.ne.s32.totalorder %s45, %s46
    %p55 = scmp.eq.s32.totalorder %s14, 0
    %p56 = por %p54, %p55
    %p57 = scmp.ne.s32.totalorder %s45, %s46
    %p58 = scmp.eq.s32.totalorder %s15, 1
    %p59 = por %p57, %p58
    %p61 = scmp.ne.s32.totalorder %s46, %s60
    %p62 = scmp.eq.s32.totalorder %s15, 0
    %p63 = por %p61, %p62
    %s65 = sadd.s32 %s64, 1
    %p68 = scmp.eq.s32.totalorder %s9, 1
    %p69 = scmp.ne.s32.totalorder %s64, %s66
    %p70 = scmp.eq.s32.totalorder %s9, 0
    %p71 = por %p69, %p70
    %p72 = scmp.ne.s32.totalorder %s64, %s66
    %p73 = scmp.eq.s32.totalorder %s14, 1
    %p74 = por %p72, %p73
    %p75 = scmp.ne.s32.totalorder %s66, %s67
    %p76 = scmp.eq.s32.totalorder %s14, 0
    %p77 = por %p75, %p76
    %p78 = scmp.ne.s32.totalorder %s66, %s67
    %p79 = scmp.eq.s32.totalorder %s15, 1
    %p80 = por %p78, %p79
    %p82 = scmp.ne.s32.totalorder %s67, %s81
    %p83 = scmp.eq.s32.totalorder %s15, 0
    %p84 = por %p82, %p83
    %s85 = ssub.s32 %s9, %s16
    %p86 = scmp.eq.s32.totalorder %s85, 0
    %s88 = sadd.s32 %s87, 1
    %s89 = scalar_select %p86, %s87, %s88
    %p92 = pneg %p86
    %p93 = scmp.eq.s32.totalorder %s9, 1
    %p94 = por %p92, %p93
    %p95 = scmp.ne.s32.totalorder %s87, %s90
    %p96 = scmp.eq.s32.totalorder %s9, 0
    %p97 = por %p95, %p96
    %p98 = scmp.ne.s32.totalorder %s87, %s90
    %p99 = scmp.eq.s32.totalorder %s14, 1
    %p100 = por %p98, %p99
    %p101 = scmp.ne.s32.totalorder %s90, %s91
    %p102 = scmp.eq.s32.totalorder %s14, 0
    %p103 = por %p101, %p102
    %p104 = scmp.ne.s32.totalorder %s90, %s91
    %p105 = scmp.eq.s32.totalorder %s15, 1
    %p106 = por %p104, %p105
    %p108 = scmp.ne.s32.totalorder %s91, %s107
    %p109 = scmp.eq.s32.totalorder %s15, 0
    %p110 = por %p108, %p109
    %p111 = scmp.le.s32.totalorder 1, %s9
    %p112 = scmp.lt.s32.totalorder %s9, 3
    %p113 = pnand %p111, %p112
    %p114 = pneg %p113
    // Predicated region
    $region9: #{recnet_v2_forward.1} parent=5 // pred_check
      _
    $region10: #{recnet_v2_forward.1} parent=5 // pred_check_branch
      %116 = sbr.rel (%p113) target = $region12
    $region11: #{recnet_v2_forward.1} parent=5 // pred_region
      %s117 = ssub.s32 %s9, 1
      // Predicated region
      $region13: #{recnet_v2_forward.1} parent=11 // pred_check
        %p118 = pneg %p56
      $region14: #{recnet_v2_forward.1} parent=11 // pred_check_branch
        %120 = sbr.rel (%p118) target = $region16
      $region15: #{recnet_v2_forward.1} parent=11 // pred_region
        _
      $region16: #{recnet_v2_forward.1} parent=11 // pred_fallthru
        _
      // Predicated region
      $region17: #{recnet_v2_forward.1} parent=11 // pred_check
        %p121 = pneg %p77
      $region18: #{recnet_v2_forward.1} parent=11 // pred_check_branch
        %123 = sbr.rel (%p121) target = $region20
      $region19: #{recnet_v2_forward.1} parent=11 // pred_region
        _
      $region20: #{recnet_v2_forward.1} parent=11 // pred_fallthru
        _
    $region12: #{recnet_v2_forward.1} parent=5 // pred_fallthru
      _
    %p124 = scmp.lt.s32.totalorder %s9, 2
    // Predicated region
    $region21: #{recnet_v2_forward.1} parent=5 // pred_check
      %p125 = pneg %p124
    $region22: #{recnet_v2_forward.1} parent=5 // pred_check_branch
      %127 = sbr.rel (%p125) target = $region24
    $region23: #{recnet_v2_forward.1} parent=5 // pred_region
      // Predicated region
      $region25: #{recnet_v2_forward.1} parent=23 // pred_check
        %p128 = pneg %p29
      $region26: #{recnet_v2_forward.1} parent=23 // pred_check_branch
        %130 = sbr.rel (%p128) target = $region28
      $region27: #{recnet_v2_forward.1} parent=23 // pred_region
        %p131 = scmp.lt.s32.totalorder %s9, 1
        %s132 = scalar_select %p131, %s9, 1
        %s133 = smul.addr %s132, 64
        %s134 = smul.addr %s133, 4
        %s135 = scalar_lea.vmem %s0, %s134
      $region28: #{recnet_v2_forward.1} parent=23 // pred_fallthru
        _
    $region24: #{recnet_v2_forward.1} parent=5 // pred_fallthru
      _
    %p136 = scmp.le.s32.totalorder 1, %s9
    %p137 = scmp.lt.s32.totalorder %s9, 3
    %p138 = pnand %p136, %p137
    %p139 = pneg %p138
    // Predicated region
    $region29: #{recnet_v2_forward.1} parent=5 // pred_check
      _
    $region30: #{recnet_v2_forward.1} parent=5 // pred_check_branch
      %141 = sbr.rel (%p138) target = $region32
    $region31: #{recnet_v2_forward.1} parent=5 // pred_region
      %s142 = ssub.s32 %s9, 1
      %p143 = scmp.lt.s32.totalorder %s14, 1
      %s144 = scalar_select %p143, %s14, 1
      %s145 = smul.addr %s144, 64
      %s146 = smul.addr %s145, 4
      %s147 = scalar_lea.vmem %s0, %s146
      %p148 = pneg %p35
      %p149 = pneg %p32
      %p150 = pneg %p56
      %p151 = pneg %p53
      %p152 = pneg %p77
      %p153 = pneg %p74
      %p154 = pneg %p103
      %p155 = pneg %p100
      %p156 = scmp.lt.s32.totalorder %s14, 1
      %s157 = scalar_select %p156, %s14, 1
      %s158 = smul.addr %s157, 4
      %s159 = smul.addr %s158, 4
      %s160 = scalar_lea.vmem %s3, %s159
      %p161 = scmp.lt.s32.totalorder %s14, 1
      %s162 = scalar_select %p161, %s14, 1
      %s163 = smul.addr %s162, 64
      %s164 = smul.addr %s163, 4
      %s165 = scalar_lea.vmem %s0, %s164
      %p166 = scmp.lt.s32.totalorder %s14, 1
      %s167 = scalar_select %p166, %s14, 1
      %s168 = smul.addr %s167, 4
      %s169 = smul.addr %s168, 4
      %s170 = scalar_lea.vmem %s3, %s169
      %v172 = vld [vmem:[%s165] sm:$0xf]
      %v173 = vld [vmem:[%s165 + $0x4] sm:$0xf]
      %v174 = vld [vmem:[%s165 + $0x8] sm:$0xf]
      %v175 = vld [vmem:[%s165 + $0xc] sm:$0xf]
      %v176 = vld [vmem:[%s165 + $0x10] sm:$0xf]
      %v177 = vld [vmem:[%s165 + $0x14] sm:$0xf]
      %v178 = vld [vmem:[%s165 + $0x18] sm:$0xf]
      %v179 = vld [vmem:[%s165 + $0x1c] sm:$0xf]
      %v180 = vld [vmem:[%s165 + $0x20] sm:$0xf]
      %v181 = vld [vmem:[%s165 + $0x24] sm:$0xf]
      %v182 = vld [vmem:[%s165 + $0x28] sm:$0xf]
      %v183 = vld [vmem:[%s165 + $0x2c] sm:$0xf]
      %v184 = vld [vmem:[%s165 + $0x30] sm:$0xf]
      %v185 = vld [vmem:[%s165 + $0x34] sm:$0xf]
      %v186 = vld [vmem:[%s165 + $0x38] sm:$0xf]
      %v187 = vld [vmem:[%s165 + $0x3c] sm:$0xf]
      %v188 = vld [vmem:[%s165 + $0x40] sm:$0xf]
      %v189 = vld [vmem:[%s165 + $0x44] sm:$0xf]
      %v190 = vld [vmem:[%s165 + $0x48] sm:$0xf]
      %v191 = vld [vmem:[%s165 + $0x4c] sm:$0xf]
      %v192 = vld [vmem:[%s165 + $0x50] sm:$0xf]
      %v193 = vld [vmem:[%s165 + $0x54] sm:$0xf]
      %v194 = vld [vmem:[%s165 + $0x58] sm:$0xf]
      %v195 = vld [vmem:[%s165 + $0x5c] sm:$0xf]
      %v196 = vld [vmem:[%s165 + $0x60] sm:$0xf]
      %v197 = vld [vmem:[%s165 + $0x64] sm:$0xf]
      %v198 = vld [vmem:[%s165 + $0x68] sm:$0xf]
      %v199 = vld [vmem:[%s165 + $0x6c] sm:$0xf]
      %v200 = vld [vmem:[%s165 + $0x70] sm:$0xf]
      %v201 = vld [vmem:[%s165 + $0x74] sm:$0xf]
      %v202 = vld [vmem:[%s165 + $0x78] sm:$0xf]
      %v203 = vld [vmem:[%s165 + $0x7c] sm:$0xf]
      %v204 = vld [vmem:[%s165 + $0x80] sm:$0xf]
      %v205 = vld [vmem:[%s165 + $0x84] sm:$0xf]
      %v206 = vld [vmem:[%s165 + $0x88] sm:$0xf]
      %v207 = vld [vmem:[%s165 + $0x8c] sm:$0xf]
      %v208 = vld [vmem:[%s165 + $0x90] sm:$0xf]
      %v209 = vld [vmem:[%s165 + $0x94] sm:$0xf]
      %v210 = vld [vmem:[%s165 + $0x98] sm:$0xf]
      %v211 = vld [vmem:[%s165 + $0x9c] sm:$0xf]
      %v212 = vld [vmem:[%s165 + $0xa0] sm:$0xf]
      %v213 = vld [vmem:[%s165 + $0xa4] sm:$0xf]
      %v214 = vld [vmem:[%s165 + $0xa8] sm:$0xf]
      %v215 = vld [vmem:[%s165 + $0xac] sm:$0xf]
      %v216 = vld [vmem:[%s165 + $0xb0] sm:$0xf]
      %v217 = vld [vmem:[%s165 + $0xb4] sm:$0xf]
      %v218 = vld [vmem:[%s165 + $0xb8] sm:$0xf]
      %v219 = vld [vmem:[%s165 + $0xbc] sm:$0xf]
      %v220 = vld [vmem:[%s165 + $0xc0] sm:$0xf]
      %v221 = vld [vmem:[%s165 + $0xc4] sm:$0xf]
      %v222 = vld [vmem:[%s165 + $0xc8] sm:$0xf]
      %v223 = vld [vmem:[%s165 + $0xcc] sm:$0xf]
      %v224 = vld [vmem:[%s165 + $0xd0] sm:$0xf]
      %v225 = vld [vmem:[%s165 + $0xd4] sm:$0xf]
      %v226 = vld [vmem:[%s165 + $0xd8] sm:$0xf]
      %v227 = vld [vmem:[%s165 + $0xdc] sm:$0xf]
      %v228 = vld [vmem:[%s165 + $0xe0] sm:$0xf]
      %v229 = vld [vmem:[%s165 + $0xe4] sm:$0xf]
      %v230 = vld [vmem:[%s165 + $0xe8] sm:$0xf]
      %v231 = vld [vmem:[%s165 + $0xec] sm:$0xf]
      %v232 = vld [vmem:[%s165 + $0xf0] sm:$0xf]
      %v233 = vld [vmem:[%s165 + $0xf4] sm:$0xf]
      %v234 = vld [vmem:[%s165 + $0xf8] sm:$0xf]
      %v235 = vld [vmem:[%s165 + $0xfc] sm:$0xf]
      %v236 = vld [vmem:[%s1] sm:$0xf]
      %v237 = vld [vmem:[%s1 + $0x4] sm:$0xf]
      %v238 = vld [vmem:[%s1 + $0x8] sm:$0xf]
      %v239 = vld [vmem:[%s1 + $0xc] sm:$0xf]
      %v240 = vld [vmem:[%s1 + $0x10] sm:$0xf]
      %v241 = vld [vmem:[%s1 + $0x14] sm:$0xf]
      %v242 = vld [vmem:[%s1 + $0x18] sm:$0xf]
      %v243 = vld [vmem:[%s1 + $0x1c] sm:$0xf]
      %v244 = vld [vmem:[%s1 + $0x20] sm:$0xf]
      %v245 = vld [vmem:[%s1 + $0x24] sm:$0xf]
      %v246 = vld [vmem:[%s1 + $0x28] sm:$0xf]
      %v247 = vld [vmem:[%s1 + $0x2c] sm:$0xf]
      %v248 = vld [vmem:[%s1 + $0x30] sm:$0xf]
      %v249 = vld [vmem:[%s1 + $0x34] sm:$0xf]
      %v250 = vld [vmem:[%s1 + $0x38] sm:$0xf]
      %v251 = vld [vmem:[%s1 + $0x3c] sm:$0xf]
      %v252 = vld [vmem:[%s2] sm:$0x1]
      %v254 = vlaneseq
      %v255 = vshrl.u32 %v254, 7
      %v256 = vsub.s32 0, %v255
      %v257 = vrot.slane %v252, %v256
      %v323 = vunpack.c.l.b16 %v172
      %v324 = vunpack.c.l.b16 %v173
      %v325 = vunpack.c.l.b16 %v174
      %v326 = vunpack.c.l.b16 %v175
      %v327 = vunpack.c.l.b16 %v176
      %v328 = vunpack.c.l.b16 %v177
      %v329 = vunpack.c.l.b16 %v178
      %v330 = vunpack.c.l.b16 %v179
      %v331 = vunpack.c.l.b16 %v180
      %v332 = vunpack.c.l.b16 %v181
      %v333 = vunpack.c.l.b16 %v182
      %v334 = vunpack.c.l.b16 %v183
      %v335 = vunpack.c.l.b16 %v184
      %v336 = vunpack.c.l.b16 %v185
      %v337 = vunpack.c.l.b16 %v186
      %v338 = vunpack.c.l.b16 %v187
      %v339 = vunpack.c.l.b16 %v188
      %v340 = vunpack.c.l.b16 %v189
      %v341 = vunpack.c.l.b16 %v190
      %v342 = vunpack.c.l.b16 %v191
      %v343 = vunpack.c.l.b16 %v192
      %v344 = vunpack.c.l.b16 %v193
      %v345 = vunpack.c.l.b16 %v194
      %v346 = vunpack.c.l.b16 %v195
      %v347 = vunpack.c.l.b16 %v196
      %v348 = vunpack.c.l.b16 %v197
      %v349 = vunpack.c.l.b16 %v198
      %v350 = vunpack.c.l.b16 %v199
      %v351 = vunpack.c.l.b16 %v200
      %v352 = vunpack.c.l.b16 %v201
      %v353 = vunpack.c.l.b16 %v202
      %v354 = vunpack.c.l.b16 %v203
      %v355 = vunpack.c.l.b16 %v204
      %v356 = vunpack.c.l.b16 %v205
      %v357 = vunpack.c.l.b16 %v206
      %v358 = vunpack.c.l.b16 %v207
      %v359 = vunpack.c.l.b16 %v208
      %v360 = vunpack.c.l.b16 %v209
      %v361 = vunpack.c.l.b16 %v210
      %v362 = vunpack.c.l.b16 %v211
      %v363 = vunpack.c.l.b16 %v212
      %v364 = vunpack.c.l.b16 %v213
      %v365 = vunpack.c.l.b16 %v214
      %v366 = vunpack.c.l.b16 %v215
      %v367 = vunpack.c.l.b16 %v216
      %v368 = vunpack.c.l.b16 %v217
      %v369 = vunpack.c.l.b16 %v218
      %v370 = vunpack.c.l.b16 %v219
      %v371 = vunpack.c.l.b16 %v220
      %v372 = vunpack.c.l.b16 %v221
      %v373 = vunpack.c.l.b16 %v222
      %v374 = vunpack.c.l.b16 %v223
      %v375 = vunpack.c.l.b16 %v224
      %v376 = vunpack.c.l.b16 %v225
      %v377 = vunpack.c.l.b16 %v226
      %v378 = vunpack.c.l.b16 %v227
      %v379 = vunpack.c.l.b16 %v228
      %v380 = vunpack.c.l.b16 %v229
      %v381 = vunpack.c.l.b16 %v230
      %v382 = vunpack.c.l.b16 %v231
      %v383 = vunpack.c.l.b16 %v232
      %v384 = vunpack.c.l.b16 %v233
      %v385 = vunpack.c.l.b16 %v234
      %v386 = vunpack.c.l.b16 %v235
      %v387 = vpack.c.b16 %v324, %v323
      %v388 = vpack.c.b16 %v326, %v325
      %v389 = vpack.c.b16 %v328, %v327
      %v390 = vpack.c.b16 %v330, %v329
      %v391 = vpack.c.b16 %v332, %v331
      %v392 = vpack.c.b16 %v334, %v333
      %v393 = vpack.c.b16 %v336, %v335
      %v394 = vpack.c.b16 %v338, %v337
      %v395 = vpack.c.b16 %v340, %v339
      %v396 = vpack.c.b16 %v342, %v341
      %v397 = vpack.c.b16 %v344, %v343
      %v398 = vpack.c.b16 %v346, %v345
      %v399 = vpack.c.b16 %v348, %v347
      %v400 = vpack.c.b16 %v350, %v349
      %v401 = vpack.c.b16 %v352, %v351
      %v402 = vpack.c.b16 %v354, %v353
      %v403 = vpack.c.b16 %v356, %v355
      %v404 = vpack.c.b16 %v358, %v357
      %v405 = vpack.c.b16 %v360, %v359
      %v406 = vpack.c.b16 %v362, %v361
      %v407 = vpack.c.b16 %v364, %v363
      %v408 = vpack.c.b16 %v366, %v365
      %v409 = vpack.c.b16 %v368, %v367
      %v410 = vpack.c.b16 %v370, %v369
      %v411 = vpack.c.b16 %v372, %v371
      %v412 = vpack.c.b16 %v374, %v373
      %v413 = vpack.c.b16 %v376, %v375
      %v414 = vpack.c.b16 %v378, %v377
      %v415 = vpack.c.b16 %v380, %v379
      %v416 = vpack.c.b16 %v382, %v381
      %v417 = vpack.c.b16 %v384, %v383
      %v418 = vpack.c.b16 %v386, %v385
      %v467 = vunpack.c.l.b16 %v236
      %v468 = vunpack.c.l.b16 %v237
      %v469 = vunpack.c.l.b16 %v238
      %v470 = vunpack.c.l.b16 %v239
      %v471 = vunpack.c.l.b16 %v240
      %v472 = vunpack.c.l.b16 %v241
      %v473 = vunpack.c.l.b16 %v242
      %v474 = vunpack.c.l.b16 %v243
      %v475 = vunpack.c.l.b16 %v244
      %v476 = vunpack.c.l.b16 %v245
      %v477 = vunpack.c.l.b16 %v246
      %v478 = vunpack.c.l.b16 %v247
      %v479 = vunpack.c.l.b16 %v248
      %v480 = vunpack.c.l.b16 %v249
      %v481 = vunpack.c.l.b16 %v250
      %v482 = vunpack.c.l.b16 %v251
      %v483 = vpack.c.b16 %v468, %v467
      %v484 = vpack.c.b16 %v470, %v469
      %v485 = vpack.c.b16 %v472, %v471
      %v486 = vpack.c.b16 %v474, %v473
      %v487 = vpack.c.b16 %v476, %v475
      %v488 = vpack.c.b16 %v478, %v477
      %v489 = vpack.c.b16 %v480, %v479
      %v490 = vpack.c.b16 %v482, %v481
      %499 = vmatprep.subr.bf16.mxu0 0
      %500 = vmatpush1.bf16.msra.mxu0 %v483
      %501 = vmatprep.subr.bf16.mxu0 0
      %502 = vmatpush1.bf16.msra.mxu0 %v484
      %503 = vmatprep.subr.bf16.mxu0 0
      %504 = vmatpush1.bf16.msra.mxu0 %v485
      %505 = vmatprep.subr.bf16.mxu0 0
      %506 = vmatpush1.bf16.msra.mxu0 %v486
      %507 = vmatprep.subr.bf16.mxu0 0
      %508 = vmatpush1.bf16.msra.mxu0 %v487
      %509 = vmatprep.subr.bf16.mxu0 0
      %510 = vmatpush1.bf16.msra.mxu0 %v488
      %511 = vmatprep.subr.bf16.mxu0 0
      %512 = vmatpush1.bf16.msra.mxu0 %v489
      %513 = vmatprep.subr.bf16.mxu0 0
      %514 = vmatpush1.bf16.msra.mxu0 %v490
      %515 = vmatprep.subr.bf16.mxu0 0
      %516 = vmatpush1.bf16.msra.mxu0 0
      %517 = vmatprep.subr.bf16.mxu0 0
      %518 = vmatpush1.bf16.msra.mxu0 0
      %519 = vmatprep.subr.bf16.mxu0 0
      %520 = vmatpush1.bf16.msra.mxu0 0
      %521 = vmatprep.subr.bf16.mxu0 0
      %522 = vmatpush1.bf16.msra.mxu0 0
      %523 = vmatprep.subr.bf16.mxu0 0
      %524 = vmatpush1.bf16.msra.mxu0 0
      %525 = vmatprep.subr.bf16.mxu0 0
      %526 = vmatpush1.bf16.msra.mxu0 0
      %527 = vmatprep.subr.bf16.mxu0 0
      %528 = vmatpush1.bf16.msra.mxu0 0
      %529 = vmatprep.subr.bf16.mxu0 0
      %530 = vmatpush1.bf16.msra.mxu0 0
      %531 = vmatprep.mubr.bf16.mxu0 0
      %532 = vmatmul.mubr.bf16.gmra.mrb[0].mxu0 %v387
      %v533 = vpop.f32.mrb[0].mxu0
      %v534 = vadd.f32 %v257, %v533
      %v535 = vpop.f32.mrb[0].mxu0
      %v536 = vpop.f32.mrb[0].mxu0
      %v537 = vadd.f32 %v257, %v536
      %v538 = vpop.f32.mrb[0].mxu0
      %539 = vmatprep.mubr.bf16.mxu0 0
      %540 = vmatmul.mubr.bf16.gmra.mrb[0].mxu0 %v388
      %v541 = vpop.f32.mrb[0].mxu0
      %v542 = vadd.f32 %v257, %v541
      %v543 = vpop.f32.mrb[0].mxu0
      %v544 = vpop.f32.mrb[0].mxu0
      %v545 = vadd.f32 %v257, %v544
      %v546 = vpop.f32.mrb[0].mxu0
      %547 = vmatprep.mubr.bf16.mxu0 0
      %548 = vmatmul.mubr.bf16.gmra.mrb[0].mxu0 %v389
      %v549 = vpop.f32.mrb[0].mxu0
      %v550 = vadd.f32 %v257, %v549
      %v551 = vpop.f32.mrb[0].mxu0
      %v552 = vpop.f32.mrb[0].mxu0
      %v553 = vadd.f32 %v257, %v552
      %v554 = vpop.f32.mrb[0].mxu0
      %555 = vmatprep.mubr.bf16.mxu0 0
      %556 = vmatmul.mubr.bf16.gmra.mrb[0].mxu0 %v390
      %v557 = vpop.f32.mrb[0].mxu0
      %v558 = vadd.f32 %v257, %v557
      %v559 = vpop.f32.mrb[0].mxu0
      %v560 = vpop.f32.mrb[0].mxu0
      %v561 = vadd.f32 %v257, %v560
      %v562 = vpop.f32.mrb[0].mxu0
      %563 = vmatprep.mubr.bf16.mxu0 0
      %564 = vmatmul.mubr.bf16.gmra.mrb[0].mxu0 %v391
      %v565 = vpop.f32.mrb[0].mxu0
      %v566 = vadd.f32 %v257, %v565
      %v567 = vpop.f32.mrb[0].mxu0
      %v568 = vpop.f32.mrb[0].mxu0
      %v569 = vadd.f32 %v257, %v568
      %v570 = vpop.f32.mrb[0].mxu0
      %571 = vmatprep.mubr.bf16.mxu0 0
      %572 = vmatmul.mubr.bf16.gmra.mrb[0].mxu0 %v392
      %v573 = vpop.f32.mrb[0].mxu0
      %v574 = vadd.f32 %v257, %v573
      %v575 = vpop.f32.mrb[0].mxu0
      %v576 = vpop.f32.mrb[0].mxu0
      %v577 = vadd.f32 %v257, %v576
      %v578 = vpop.f32.mrb[0].mxu0
      %579 = vmatprep.mubr.bf16.mxu0 0
      %580 = vmatmul.mubr.bf16.gmra.mrb[0].mxu0 %v393
      %v581 = vpop.f32.mrb[0].mxu0
      %v582 = vadd.f32 %v257, %v581
      %v583 = vpop.f32.mrb[0].mxu0
      %v584 = vpop.f32.mrb[0].mxu0
      %v585 = vadd.f32 %v257, %v584
      %v586 = vpop.f32.mrb[0].mxu0
      %587 = vmatprep.mubr.bf16.mxu0 0
      %588 = vmatmul.mubr.bf16.gmra.mrb[0].mxu0 %v394
      %v589 = vpop.f32.mrb[0].mxu0
      %v590 = vadd.f32 %v257, %v589
      %v591 = vpop.f32.mrb[0].mxu0
      %v592 = vpop.f32.mrb[0].mxu0
      %v593 = vadd.f32 %v257, %v592
      %v594 = vpop.f32.mrb[0].mxu0
      %595 = vmatprep.mubr.bf16.mxu0 0
      %596 = vmatmul.mubr.bf16.gmra.mrb[0].mxu0 %v395
      %v597 = vpop.f32.mrb[0].mxu0
      %v598 = vadd.f32 %v257, %v597
      %v599 = vpop.f32.mrb[0].mxu0
      %v600 = vpop.f32.mrb[0].mxu0
      %v601 = vadd.f32 %v257, %v600
      %v602 = vpop.f32.mrb[0].mxu0
      %603 = vmatprep.mubr.bf16.mxu0 0
      %604 = vmatmul.mubr.bf16.gmra.mrb[0].mxu0 %v396
      %v605 = vpop.f32.mrb[0].mxu0
      %v606 = vadd.f32 %v257, %v605
      %v607 = vpop.f32.mrb[0].mxu0
      %v608 = vpop.f32.mrb[0].mxu0
      %v609 = vadd.f32 %v257, %v608
      %v610 = vpop.f32.mrb[0].mxu0
      %611 = vmatprep.mubr.bf16.mxu0 0
      %612 = vmatmul.mubr.bf16.gmra.mrb[0].mxu0 %v397
      %v613 = vpop.f32.mrb[0].mxu0
      %v614 = vadd.f32 %v257, %v613
      %v615 = vpop.f32.mrb[0].mxu0
      %v616 = vpop.f32.mrb[0].mxu0
      %v617 = vadd.f32 %v257, %v616
      %v618 = vpop.f32.mrb[0].mxu0
      %619 = vmatprep.mubr.bf16.mxu0 0
      %620 = vmatmul.mubr.bf16.gmra.mrb[0].mxu0 %v398
      %v621 = vpop.f32.mrb[0].mxu0
      %v622 = vadd.f32 %v257, %v621
      %v623 = vpop.f32.mrb[0].mxu0
      %v624 = vpop.f32.mrb[0].mxu0
      %v625 = vadd.f32 %v257, %v624
      %v626 = vpop.f32.mrb[0].mxu0
      %627 = vmatprep.mubr.bf16.mxu0 0
      %628 = vmatmul.mubr.bf16.gmra.mrb[0].mxu0 %v399
      %v629 = vpop.f32.mrb[0].mxu0
      %v630 = vadd.f32 %v257, %v629
      %v631 = vpop.f32.mrb[0].mxu0
      %v632 = vpop.f32.mrb[0].mxu0
      %v633 = vadd.f32 %v257, %v632
      %v634 = vpop.f32.mrb[0].mxu0
      %635 = vmatprep.mubr.bf16.mxu0 0
      %636 = vmatmul.mubr.bf16.gmra.mrb[0].mxu0 %v400
      %v637 = vpop.f32.mrb[0].mxu0
      %v638 = vadd.f32 %v257, %v637
      %v639 = vpop.f32.mrb[0].mxu0
      %v640 = vpop.f32.mrb[0].mxu0
      %v641 = vadd.f32 %v257, %v640
      %v642 = vpop.f32.mrb[0].mxu0
      %643 = vmatprep.mubr.bf16.mxu0 0
      %644 = vmatmul.mubr.bf16.gmra.mrb[0].mxu0 %v401
      %v645 = vpop.f32.mrb[0].mxu0
      %v646 = vadd.f32 %v257, %v645
      %v647 = vpop.f32.mrb[0].mxu0
      %v648 = vpop.f32.mrb[0].mxu0
      %v649 = vadd.f32 %v257, %v648
      %v650 = vpop.f32.mrb[0].mxu0
      %651 = vmatprep.mubr.bf16.mxu0 0
      %652 = vmatmul.mubr.bf16.gmra.mrb[0].mxu0 %v402
      %v653 = vpop.f32.mrb[0].mxu0
      %v654 = vadd.f32 %v257, %v653
      %v655 = vpop.f32.mrb[0].mxu0
      %v656 = vpop.f32.mrb[0].mxu0
      %v657 = vadd.f32 %v257, %v656
      %v658 = vpop.f32.mrb[0].mxu0
      %659 = vmatprep.mubr.bf16.mxu0 0
      %660 = vmatmul.mubr.bf16.gmra.mrb[0].mxu0 %v403
      %v661 = vpop.f32.mrb[0].mxu0
      %v662 = vadd.f32 %v257, %v661
      %v663 = vpop.f32.mrb[0].mxu0
      %v664 = vpop.f32.mrb[0].mxu0
      %v665 = vadd.f32 %v257, %v664
      %v666 = vpop.f32.mrb[0].mxu0
      %667 = vmatprep.mubr.bf16.mxu0 0
      %668 = vmatmul.mubr.bf16.gmra.mrb[0].mxu0 %v404
      %v669 = vpop.f32.mrb[0].mxu0
      %v670 = vadd.f32 %v257, %v669
      %v671 = vpop.f32.mrb[0].mxu0
      %v672 = vpop.f32.mrb[0].mxu0
      %v673 = vadd.f32 %v257, %v672
      %v674 = vpop.f32.mrb[0].mxu0
      %675 = vmatprep.mubr.bf16.mxu0 0
      %676 = vmatmul.mubr.bf16.gmra.mrb[0].mxu0 %v405
      %v677 = vpop.f32.mrb[0].mxu0
      %v678 = vadd.f32 %v257, %v677
      %v679 = vpop.f32.mrb[0].mxu0
      %v680 = vpop.f32.mrb[0].mxu0
      %v681 = vadd.f32 %v257, %v680
      %v682 = vpop.f32.mrb[0].mxu0
      %683 = vmatprep.mubr.bf16.mxu0 0
      %684 = vmatmul.mubr.bf16.gmra.mrb[0].mxu0 %v406
      %v685 = vpop.f32.mrb[0].mxu0
      %v686 = vadd.f32 %v257, %v685
      %v687 = vpop.f32.mrb[0].mxu0
      %v688 = vpop.f32.mrb[0].mxu0
      %v689 = vadd.f32 %v257, %v688
      %v690 = vpop.f32.mrb[0].mxu0
      %691 = vmatprep.mubr.bf16.mxu0 0
      %692 = vmatmul.mubr.bf16.gmra.mrb[0].mxu0 %v407
      %v693 = vpop.f32.mrb[0].mxu0
      %v694 = vadd.f32 %v257, %v693
      %v695 = vpop.f32.mrb[0].mxu0
      %v696 = vpop.f32.mrb[0].mxu0
      %v697 = vadd.f32 %v257, %v696
      %v698 = vpop.f32.mrb[0].mxu0
      %699 = vmatprep.mubr.bf16.mxu0 0
      %700 = vmatmul.mubr.bf16.gmra.mrb[0].mxu0 %v408
      %v701 = vpop.f32.mrb[0].mxu0
      %v702 = vadd.f32 %v257, %v701
      %v703 = vpop.f32.mrb[0].mxu0
      %v704 = vpop.f32.mrb[0].mxu0
      %v705 = vadd.f32 %v257, %v704
      %v706 = vpop.f32.mrb[0].mxu0
      %707 = vmatprep.mubr.bf16.mxu0 0
      %708 = vmatmul.mubr.bf16.gmra.mrb[0].mxu0 %v409
      %v709 = vpop.f32.mrb[0].mxu0
      %v710 = vadd.f32 %v257, %v709
      %v711 = vpop.f32.mrb[0].mxu0
      %v712 = vpop.f32.mrb[0].mxu0
      %v713 = vadd.f32 %v257, %v712
      %v714 = vpop.f32.mrb[0].mxu0
      %715 = vmatprep.mubr.bf16.mxu0 0
      %716 = vmatmul.mubr.bf16.gmra.mrb[0].mxu0 %v410
      %v717 = vpop.f32.mrb[0].mxu0
      %v718 = vadd.f32 %v257, %v717
      %v719 = vpop.f32.mrb[0].mxu0
      %v720 = vpop.f32.mrb[0].mxu0
      %v721 = vadd.f32 %v257, %v720
      %v722 = vpop.f32.mrb[0].mxu0
      %723 = vmatprep.mubr.bf16.mxu0 0
      %724 = vmatmul.mubr.bf16.gmra.mrb[0].mxu0 %v411
      %v725 = vpop.f32.mrb[0].mxu0
      %v726 = vadd.f32 %v257, %v725
      %v727 = vpop.f32.mrb[0].mxu0
      %v728 = vpop.f32.mrb[0].mxu0
      %v729 = vadd.f32 %v257, %v728
      %v730 = vpop.f32.mrb[0].mxu0
      %731 = vmatprep.mubr.bf16.mxu0 0
      %732 = vmatmul.mubr.bf16.gmra.mrb[0].mxu0 %v412
      %v733 = vpop.f32.mrb[0].mxu0
      %v734 = vadd.f32 %v257, %v733
      %v735 = vpop.f32.mrb[0].mxu0
      %v736 = vpop.f32.mrb[0].mxu0
      %v737 = vadd.f32 %v257, %v736
      %v738 = vpop.f32.mrb[0].mxu0
      %739 = vmatprep.mubr.bf16.mxu0 0
      %740 = vmatmul.mubr.bf16.gmra.mrb[0].mxu0 %v413
      %v741 = vpop.f32.mrb[0].mxu0
      %v742 = vadd.f32 %v257, %v741
      %v743 = vpop.f32.mrb[0].mxu0
      %v744 = vpop.f32.mrb[0].mxu0
      %v745 = vadd.f32 %v257, %v744
      %v746 = vpop.f32.mrb[0].mxu0
      %747 = vmatprep.mubr.bf16.mxu0 0
      %748 = vmatmul.mubr.bf16.gmra.mrb[0].mxu0 %v414
      %v749 = vpop.f32.mrb[0].mxu0
      %v750 = vadd.f32 %v257, %v749
      %v751 = vpop.f32.mrb[0].mxu0
      %v752 = vpop.f32.mrb[0].mxu0
      %v753 = vadd.f32 %v257, %v752
      %v754 = vpop.f32.mrb[0].mxu0
      %755 = vmatprep.mubr.bf16.mxu0 0
      %756 = vmatmul.mubr.bf16.gmra.mrb[0].mxu0 %v415
      %v757 = vpop.f32.mrb[0].mxu0
      %v758 = vadd.f32 %v257, %v757
      %v759 = vpop.f32.mrb[0].mxu0
      %v760 = vpop.f32.mrb[0].mxu0
      %v761 = vadd.f32 %v257, %v760
      %v762 = vpop.f32.mrb[0].mxu0
      %763 = vmatprep.mubr.bf16.mxu0 0
      %764 = vmatmul.mubr.bf16.gmra.mrb[0].mxu0 %v416
      %v765 = vpop.f32.mrb[0].mxu0
      %v766 = vadd.f32 %v257, %v765
      %v767 = vpop.f32.mrb[0].mxu0
      %v768 = vpop.f32.mrb[0].mxu0
      %v769 = vadd.f32 %v257, %v768
      %v770 = vpop.f32.mrb[0].mxu0
      %771 = vmatprep.mubr.bf16.mxu0 0
      %772 = vmatmul.mubr.bf16.gmra.mrb[0].mxu0 %v417
      %v773 = vpop.f32.mrb[0].mxu0
      %v774 = vadd.f32 %v257, %v773
      %v775 = vpop.f32.mrb[0].mxu0
      %v776 = vpop.f32.mrb[0].mxu0
      %v777 = vadd.f32 %v257, %v776
      %v778 = vpop.f32.mrb[0].mxu0
      %779 = vmatprep.mubr.bf16.mxu0 0
      %780 = vmatmul.mubr.bf16.gmra.mrb[0].mxu0 %v418
      %v781 = vpop.f32.mrb[0].mxu0
      %v782 = vadd.f32 %v257, %v781
      %v783 = vpop.f32.mrb[0].mxu0
      %v784 = vpop.f32.mrb[0].mxu0
      %v785 = vadd.f32 %v257, %v784
      %v786 = vpop.f32.mrb[0].mxu0
      %787 = vdwg.mxu0
      %v788 = vmax.f32 %v534, 0.0
      %v789 = vmax.f32 %v537, 0.0
      %v790 = vmax.f32 %v542, 0.0
      %v791 = vmax.f32 %v545, 0.0
      %v792 = vmax.f32 %v550, 0.0
      %v793 = vmax.f32 %v553, 0.0
      %v794 = vmax.f32 %v558, 0.0
      %v795 = vmax.f32 %v561, 0.0
      %v796 = vmax.f32 %v566, 0.0
      %v797 = vmax.f32 %v569, 0.0
      %v798 = vmax.f32 %v574, 0.0
      %v799 = vmax.f32 %v577, 0.0
      %v800 = vmax.f32 %v582, 0.0
      %v801 = vmax.f32 %v585, 0.0
      %v802 = vmax.f32 %v590, 0.0
      %v803 = vmax.f32 %v593, 0.0
      %v804 = vmax.f32 %v598, 0.0
      %v805 = vmax.f32 %v601, 0.0
      %v806 = vmax.f32 %v606, 0.0
      %v807 = vmax.f32 %v609, 0.0
      %v808 = vmax.f32 %v614, 0.0
      %v809 = vmax.f32 %v617, 0.0
      %v810 = vmax.f32 %v622, 0.0
      %v811 = vmax.f32 %v625, 0.0
      %v812 = vmax.f32 %v630, 0.0
      %v813 = vmax.f32 %v633, 0.0
      %v814 = vmax.f32 %v638, 0.0
      %v815 = vmax.f32 %v641, 0.0
      %v816 = vmax.f32 %v646, 0.0
      %v817 = vmax.f32 %v649, 0.0
      %v818 = vmax.f32 %v654, 0.0
      %v819 = vmax.f32 %v657, 0.0
      %v820 = vmax.f32 %v662, 0.0
      %v821 = vmax.f32 %v665, 0.0
      %v822 = vmax.f32 %v670, 0.0
      %v823 = vmax.f32 %v673, 0.0
      %v824 = vmax.f32 %v678, 0.0
      %v825 = vmax.f32 %v681, 0.0
      %v826 = vmax.f32 %v686, 0.0
      %v827 = vmax.f32 %v689, 0.0
      %v828 = vmax.f32 %v694, 0.0
      %v829 = vmax.f32 %v697, 0.0
      %v830 = vmax.f32 %v702, 0.0
      %v831 = vmax.f32 %v705, 0.0
      %v832 = vmax.f32 %v710, 0.0
      %v833 = vmax.f32 %v713, 0.0
      %v834 = vmax.f32 %v718, 0.0
      %v835 = vmax.f32 %v721, 0.0
      %v836 = vmax.f32 %v726, 0.0
      %v837 = vmax.f32 %v729, 0.0
      %v838 = vmax.f32 %v734, 0.0
      %v839 = vmax.f32 %v737, 0.0
      %v840 = vmax.f32 %v742, 0.0
      %v841 = vmax.f32 %v745, 0.0
      %v842 = vmax.f32 %v750, 0.0
      %v843 = vmax.f32 %v753, 0.0
      %v844 = vmax.f32 %v758, 0.0
      %v845 = vmax.f32 %v761, 0.0
      %v846 = vmax.f32 %v766, 0.0
      %v847 = vmax.f32 %v769, 0.0
      %v848 = vmax.f32 %v774, 0.0
      %v849 = vmax.f32 %v777, 0.0
      %v850 = vmax.f32 %v782, 0.0
      %v851 = vmax.f32 %v785, 0.0
      %v852 = vmax.f32 %v788, %v789
      %v853 = vrot.slane %v852, 4
      %v854 = vmax.f32 %v852, %v853
      %v855 = vrot.slane %v854, 2
      %v856 = vmax.f32 %v854, %v855
      %v857 = vrot.slane %v856, 1
      %v858 = vmax.f32 %v856, %v857
      %v859 = vmax.f32 %v790, %v791
      %v860 = vrot.slane %v859, 4
      %v861 = vmax.f32 %v859, %v860
      %v862 = vrot.slane %v861, 2
      %v863 = vmax.f32 %v861, %v862
      %v864 = vrot.slane %v863, 1
      %v865 = vmax.f32 %v863, %v864
      %v866 = vmax.f32 %v792, %v793
      %v867 = vrot.slane %v866, 4
      %v868 = vmax.f32 %v866, %v867
      %v869 = vrot.slane %v868, 2
      %v870 = vmax.f32 %v868, %v869
      %v871 = vrot.slane %v870, 1
      %v872 = vmax.f32 %v870, %v871
      %v873 = vmax.f32 %v794, %v795
      %v874 = vrot.slane %v873, 4
      %v875 = vmax.f32 %v873, %v874
      %v876 = vrot.slane %v875, 2
      %v877 = vmax.f32 %v875, %v876
      %v878 = vrot.slane %v877, 1
      %v879 = vmax.f32 %v877, %v878
      %v880 = vmax.f32 %v796, %v797
      %v881 = vrot.slane %v880, 4
      %v882 = vmax.f32 %v880, %v881
      %v883 = vrot.slane %v882, 2
      %v884 = vmax.f32 %v882, %v883
      %v885 = vrot.slane %v884, 1
      %v886 = vmax.f32 %v884, %v885
      %v887 = vmax.f32 %v798, %v799
      %v888 = vrot.slane %v887, 4
      %v889 = vmax.f32 %v887, %v888
      %v890 = vrot.slane %v889, 2
      %v891 = vmax.f32 %v889, %v890
      %v892 = vrot.slane %v891, 1
      %v893 = vmax.f32 %v891, %v892
      %v894 = vmax.f32 %v800, %v801
      %v895 = vrot.slane %v894, 4
      %v896 = vmax.f32 %v894, %v895
      %v897 = vrot.slane %v896, 2
      %v898 = vmax.f32 %v896, %v897
      %v899 = vrot.slane %v898, 1
      %v900 = vmax.f32 %v898, %v899
      %v901 = vmax.f32 %v802, %v803
      %v902 = vrot.slane %v901, 4
      %v903 = vmax.f32 %v901, %v902
      %v904 = vrot.slane %v903, 2
      %v905 = vmax.f32 %v903, %v904
      %v906 = vrot.slane %v905, 1
      %v907 = vmax.f32 %v905, %v906
      %v908 = vmax.f32 %v804, %v805
      %v909 = vrot.slane %v908, 4
      %v910 = vmax.f32 %v908, %v909
      %v911 = vrot.slane %v910, 2
      %v912 = vmax.f32 %v910, %v911
      %v913 = vrot.slane %v912, 1
      %v914 = vmax.f32 %v912, %v913
      %v915 = vmax.f32 %v806, %v807
      %v916 = vrot.slane %v915, 4
      %v917 = vmax.f32 %v915, %v916
      %v918 = vrot.slane %v917, 2
      %v919 = vmax.f32 %v917, %v918
      %v920 = vrot.slane %v919, 1
      %v921 = vmax.f32 %v919, %v920
      %v922 = vmax.f32 %v808, %v809
      %v923 = vrot.slane %v922, 4
      %v924 = vmax.f32 %v922, %v923
      %v925 = vrot.slane %v924, 2
      %v926 = vmax.f32 %v924, %v925
      %v927 = vrot.slane %v926, 1
      %v928 = vmax.f32 %v926, %v927
      %v929 = vmax.f32 %v810, %v811
      %v930 = vrot.slane %v929, 4
      %v931 = vmax.f32 %v929, %v930
      %v932 = vrot.slane %v931, 2
      %v933 = vmax.f32 %v931, %v932
      %v934 = vrot.slane %v933, 1
      %v935 = vmax.f32 %v933, %v934
      %v936 = vmax.f32 %v812, %v813
      %v937 = vrot.slane %v936, 4
      %v938 = vmax.f32 %v936, %v937
      %v939 = vrot.slane %v938, 2
      %v940 = vmax.f32 %v938, %v939
      %v941 = vrot.slane %v940, 1
      %v942 = vmax.f32 %v940, %v941
      %v943 = vmax.f32 %v814, %v815
      %v944 = vrot.slane %v943, 4
      %v945 = vmax.f32 %v943, %v944
      %v946 = vrot.slane %v945, 2
      %v947 = vmax.f32 %v945, %v946
      %v948 = vrot.slane %v947, 1
      %v949 = vmax.f32 %v947, %v948
      %v950 = vmax.f32 %v816, %v817
      %v951 = vrot.slane %v950, 4
      %v952 = vmax.f32 %v950, %v951
      %v953 = vrot.slane %v952, 2
      %v954 = vmax.f32 %v952, %v953
      %v955 = vrot.slane %v954, 1
      %v956 = vmax.f32 %v954, %v955
      %v957 = vmax.f32 %v818, %v819
      %v958 = vrot.slane %v957, 4
      %v959 = vmax.f32 %v957, %v958
      %v960 = vrot.slane %v959, 2
      %v961 = vmax.f32 %v959, %v960
      %v962 = vrot.slane %v961, 1
      %v963 = vmax.f32 %v961, %v962
      %v964 = vmax.f32 %v820, %v821
      %v965 = vrot.slane %v964, 4
      %v966 = vmax.f32 %v964, %v965
      %v967 = vrot.slane %v966, 2
      %v968 = vmax.f32 %v966, %v967
      %v969 = vrot.slane %v968, 1
      %v970 = vmax.f32 %v968, %v969
      %v971 = vmax.f32 %v822, %v823
      %v972 = vrot.slane %v971, 4
      %v973 = vmax.f32 %v971, %v972
      %v974 = vrot.slane %v973, 2
      %v975 = vmax.f32 %v973, %v974
      %v976 = vrot.slane %v975, 1
      %v977 = vmax.f32 %v975, %v976
      %v978 = vmax.f32 %v824, %v825
      %v979 = vrot.slane %v978, 4
      %v980 = vmax.f32 %v978, %v979
      %v981 = vrot.slane %v980, 2
      %v982 = vmax.f32 %v980, %v981
      %v983 = vrot.slane %v982, 1
      %v984 = vmax.f32 %v982, %v983
      %v985 = vmax.f32 %v826, %v827
      %v986 = vrot.slane %v985, 4
      %v987 = vmax.f32 %v985, %v986
      %v988 = vrot.slane %v987, 2
      %v989 = vmax.f32 %v987, %v988
      %v990 = vrot.slane %v989, 1
      %v991 = vmax.f32 %v989, %v990
      %v992 = vmax.f32 %v828, %v829
      %v993 = vrot.slane %v992, 4
      %v994 = vmax.f32 %v992, %v993
      %v995 = vrot.slane %v994, 2
      %v996 = vmax.f32 %v994, %v995
      %v997 = vrot.slane %v996, 1
      %v998 = vmax.f32 %v996, %v997
      %v999 = vmax.f32 %v830, %v831
      %v1000 = vrot.slane %v999, 4
      %v1001 = vmax.f32 %v999, %v1000
      %v1002 = vrot.slane %v1001, 2
      %v1003 = vmax.f32 %v1001, %v1002
      %v1004 = vrot.slane %v1003, 1
      %v1005 = vmax.f32 %v1003, %v1004
      %v1006 = vmax.f32 %v832, %v833
      %v1007 = vrot.slane %v1006, 4
      %v1008 = vmax.f32 %v1006, %v1007
      %v1009 = vrot.slane %v1008, 2
      %v1010 = vmax.f32 %v1008, %v1009
      %v1011 = vrot.slane %v1010, 1
      %v1012 = vmax.f32 %v1010, %v1011
      %v1013 = vmax.f32 %v834, %v835
      %v1014 = vrot.slane %v1013, 4
      %v1015 = vmax.f32 %v1013, %v1014
      %v1016 = vrot.slane %v1015, 2
      %v1017 = vmax.f32 %v1015, %v1016
      %v1018 = vrot.slane %v1017, 1
      %v1019 = vmax.f32 %v1017, %v1018
      %v1020 = vmax.f32 %v836, %v837
      %v1021 = vrot.slane %v1020, 4
      %v1022 = vmax.f32 %v1020, %v1021
      %v1023 = vrot.slane %v1022, 2
      %v1024 = vmax.f32 %v1022, %v1023
      %v1025 = vrot.slane %v1024, 1
      %v1026 = vmax.f32 %v1024, %v1025
      %v1027 = vmax.f32 %v838, %v839
      %v1028 = vrot.slane %v1027, 4
      %v1029 = vmax.f32 %v1027, %v1028
      %v1030 = vrot.slane %v1029, 2
      %v1031 = vmax.f32 %v1029, %v1030
      %v1032 = vrot.slane %v1031, 1
      %v1033 = vmax.f32 %v1031, %v1032
      %v1034 = vmax.f32 %v840, %v841
      %v1035 = vrot.slane %v1034, 4
      %v1036 = vmax.f32 %v1034, %v1035
      %v1037 = vrot.slane %v1036, 2
      %v1038 = vmax.f32 %v1036, %v1037
      %v1039 = vrot.slane %v1038, 1
      %v1040 = vmax.f32 %v1038, %v1039
      %v1041 = vmax.f32 %v842, %v843
      %v1042 = vrot.slane %v1041, 4
      %v1043 = vmax.f32 %v1041, %v1042
      %v1044 = vrot.slane %v1043, 2
      %v1045 = vmax.f32 %v1043, %v1044
      %v1046 = vrot.slane %v1045, 1
      %v1047 = vmax.f32 %v1045, %v1046
      %v1048 = vmax.f32 %v844, %v845
      %v1049 = vrot.slane %v1048, 4
      %v1050 = vmax.f32 %v1048, %v1049
      %v1051 = vrot.slane %v1050, 2
      %v1052 = vmax.f32 %v1050, %v1051
      %v1053 = vrot.slane %v1052, 1
      %v1054 = vmax.f32 %v1052, %v1053
      %v1055 = vmax.f32 %v846, %v847
      %v1056 = vrot.slane %v1055, 4
      %v1057 = vmax.f32 %v1055, %v1056
      %v1058 = vrot.slane %v1057, 2
      %v1059 = vmax.f32 %v1057, %v1058
      %v1060 = vrot.slane %v1059, 1
      %v1061 = vmax.f32 %v1059, %v1060
      %v1062 = vmax.f32 %v848, %v849
      %v1063 = vrot.slane %v1062, 4
      %v1064 = vmax.f32 %v1062, %v1063
      %v1065 = vrot.slane %v1064, 2
      %v1066 = vmax.f32 %v1064, %v1065
      %v1067 = vrot.slane %v1066, 1
      %v1068 = vmax.f32 %v1066, %v1067
      %v1069 = vmax.f32 %v850, %v851
      %v1070 = vrot.slane %v1069, 4
      %v1071 = vmax.f32 %v1069, %v1070
      %v1072 = vrot.slane %v1071, 2
      %v1073 = vmax.f32 %v1071, %v1072
      %v1074 = vrot.slane %v1073, 1
      %v1075 = vmax.f32 %v1073, %v1074
      %v1076 = vpack.c.bf16 %v858, %v858
      %v1077 = vpack.c.bf16 %v865, %v865
      %v1078 = vpack.c.bf16 %v872, %v872
      %v1079 = vpack.c.bf16 %v879, %v879
      %v1080 = vpack.c.bf16 %v886, %v886
      %v1081 = vpack.c.bf16 %v893, %v893
      %v1082 = vpack.c.bf16 %v900, %v900
      %v1083 = vpack.c.bf16 %v907, %v907
      %v1084 = vpack.c.bf16 %v914, %v914
      %v1085 = vpack.c.bf16 %v921, %v921
      %v1086 = vpack.c.bf16 %v928, %v928
      %v1087 = vpack.c.bf16 %v935, %v935
      %v1088 = vpack.c.bf16 %v942, %v942
      %v1089 = vpack.c.bf16 %v949, %v949
      %v1090 = vpack.c.bf16 %v956, %v956
      %v1091 = vpack.c.bf16 %v963, %v963
      %v1092 = vpack.c.bf16 %v970, %v970
      %v1093 = vpack.c.bf16 %v977, %v977
      %v1094 = vpack.c.bf16 %v984, %v984
      %v1095 = vpack.c.bf16 %v991, %v991
      %v1096 = vpack.c.bf16 %v998, %v998
      %v1097 = vpack.c.bf16 %v1005, %v1005
      %v1098 = vpack.c.bf16 %v1012, %v1012
      %v1099 = vpack.c.bf16 %v1019, %v1019
      %v1100 = vpack.c.bf16 %v1026, %v1026
      %v1101 = vpack.c.bf16 %v1033, %v1033
      %v1102 = vpack.c.bf16 %v1040, %v1040
      %v1103 = vpack.c.bf16 %v1047, %v1047
      %v1104 = vpack.c.bf16 %v1054, %v1054
      %v1105 = vpack.c.bf16 %v1061, %v1061
      %v1106 = vpack.c.bf16 %v1068, %v1068
      %v1107 = vpack.c.bf16 %v1075, %v1075
      %v1140 = vunpack.c.l.b16 %v1076
      %v1141 = vunpack.c.l.b16 %v1077
      %v1142 = vunpack.c.l.b16 %v1078
      %v1143 = vunpack.c.l.b16 %v1079
      %v1144 = vunpack.c.l.b16 %v1080
      %v1145 = vunpack.c.l.b16 %v1081
      %v1146 = vunpack.c.l.b16 %v1082
      %v1147 = vunpack.c.l.b16 %v1083
      %v1148 = vunpack.c.l.b16 %v1084
      %v1149 = vunpack.c.l.b16 %v1085
      %v1150 = vunpack.c.l.b16 %v1086
      %v1151 = vunpack.c.l.b16 %v1087
      %v1152 = vunpack.c.l.b16 %v1088
      %v1153 = vunpack.c.l.b16 %v1089
      %v1154 = vunpack.c.l.b16 %v1090
      %v1155 = vunpack.c.l.b16 %v1091
      %v1156 = vunpack.c.l.b16 %v1092
      %v1157 = vunpack.c.l.b16 %v1093
      %v1158 = vunpack.c.l.b16 %v1094
      %v1159 = vunpack.c.l.b16 %v1095
      %v1160 = vunpack.c.l.b16 %v1096
      %v1161 = vunpack.c.l.b16 %v1097
      %v1162 = vunpack.c.l.b16 %v1098
      %v1163 = vunpack.c.l.b16 %v1099
      %v1164 = vunpack.c.l.b16 %v1100
      %v1165 = vunpack.c.l.b16 %v1101
      %v1166 = vunpack.c.l.b16 %v1102
      %v1167 = vunpack.c.l.b16 %v1103
      %v1168 = vunpack.c.l.b16 %v1104
      %v1169 = vunpack.c.l.b16 %v1105
      %v1170 = vunpack.c.l.b16 %v1106
      %v1171 = vunpack.c.l.b16 %v1107
      %v1172 = vpack.c.b16 %v1140, %v1140
      %v1173 = vpack.c.b16 %v1141, %v1141
      %v1174 = vpack.c.b16 %v1142, %v1142
      %v1175 = vpack.c.b16 %v1143, %v1143
      %v1176 = vpack.c.b16 %v1144, %v1144
      %v1177 = vpack.c.b16 %v1145, %v1145
      %v1178 = vpack.c.b16 %v1146, %v1146
      %v1179 = vpack.c.b16 %v1147, %v1147
      %v1180 = vpack.c.b16 %v1148, %v1148
      %v1181 = vpack.c.b16 %v1149, %v1149
      %v1182 = vpack.c.b16 %v1150, %v1150
      %v1183 = vpack.c.b16 %v1151, %v1151
      %v1184 = vpack.c.b16 %v1152, %v1152
      %v1185 = vpack.c.b16 %v1153, %v1153
      %v1186 = vpack.c.b16 %v1154, %v1154
      %v1187 = vpack.c.b16 %v1155, %v1155
      %v1188 = vpack.c.b16 %v1156, %v1156
      %v1189 = vpack.c.b16 %v1157, %v1157
      %v1190 = vpack.c.b16 %v1158, %v1158
      %v1191 = vpack.c.b16 %v1159, %v1159
      %v1192 = vpack.c.b16 %v1160, %v1160
      %v1193 = vpack.c.b16 %v1161, %v1161
      %v1194 = vpack.c.b16 %v1162, %v1162
      %v1195 = vpack.c.b16 %v1163, %v1163
      %v1196 = vpack.c.b16 %v1164, %v1164
      %v1197 = vpack.c.b16 %v1165, %v1165
      %v1198 = vpack.c.b16 %v1166, %v1166
      %v1199 = vpack.c.b16 %v1167, %v1167
      %v1200 = vpack.c.b16 %v1168, %v1168
      %v1201 = vpack.c.b16 %v1169, %v1169
      %v1202 = vpack.c.b16 %v1170, %v1170
      %v1203 = vpack.c.b16 %v1171, %v1171
      %v1204 = vunpack.c.l.b16 %v1172
      %v1205 = vunpack.c.l.b16 %v1173
      %v1206 = vunpack.c.l.b16 %v1174
      %v1207 = vunpack.c.l.b16 %v1175
      %v1208 = vunpack.c.l.b16 %v1176
      %v1209 = vunpack.c.l.b16 %v1177
      %v1210 = vunpack.c.l.b16 %v1178
      %v1211 = vunpack.c.l.b16 %v1179
      %v1212 = vunpack.c.l.b16 %v1180
      %v1213 = vunpack.c.l.b16 %v1181
      %v1214 = vunpack.c.l.b16 %v1182
      %v1215 = vunpack.c.l.b16 %v1183
      %v1216 = vunpack.c.l.b16 %v1184
      %v1217 = vunpack.c.l.b16 %v1185
      %v1218 = vunpack.c.l.b16 %v1186
      %v1219 = vunpack.c.l.b16 %v1187
      %v1220 = vunpack.c.l.b16 %v1188
      %v1221 = vunpack.c.l.b16 %v1189
      %v1222 = vunpack.c.l.b16 %v1190
      %v1223 = vunpack.c.l.b16 %v1191
      %v1224 = vunpack.c.l.b16 %v1192
      %v1225 = vunpack.c.l.b16 %v1193
      %v1226 = vunpack.c.l.b16 %v1194
      %v1227 = vunpack.c.l.b16 %v1195
      %v1228 = vunpack.c.l.b16 %v1196
      %v1229 = vunpack.c.l.b16 %v1197
      %v1230 = vunpack.c.l.b16 %v1198
      %v1231 = vunpack.c.l.b16 %v1199
      %v1232 = vunpack.c.l.b16 %v1200
      %v1233 = vunpack.c.l.b16 %v1201
      %v1234 = vunpack.c.l.b16 %v1202
      %v1235 = vunpack.c.l.b16 %v1203
      %vm1236 = vcmask 1041409
      %v1237 = vsel %vm1236, %v1205, %v1204
      %vm1238 = vcmask 1042434
      %v1239 = vsel %vm1238, %v1206, %v1237
      %vm1240 = vcmask 1043459
      %v1241 = vsel %vm1240, %v1207, %v1239
      %vm1242 = vcmask 1044484
      %v1243 = vsel %vm1242, %v1208, %v1241
      %vm1244 = vcmask 1045509
      %v1245 = vsel %vm1244, %v1209, %v1243
      %vm1246 = vcmask 1046534
      %v1247 = vsel %vm1246, %v1210, %v1245
      %vm1248 = vcmask 1047559
      %v1249 = vsel %vm1248, %v1211, %v1247
      %v1250 = vsel %vm1236, %v1213, %v1212
      %v1251 = vsel %vm1238, %v1214, %v1250
      %v1252 = vsel %vm1240, %v1215, %v1251
      %v1253 = vsel %vm1242, %v1216, %v1252
      %v1254 = vsel %vm1244, %v1217, %v1253
      %v1255 = vsel %vm1246, %v1218, %v1254
      %v1256 = vsel %vm1248, %v1219, %v1255
      %v1257 = vsel %vm1236, %v1221, %v1220
      %v1258 = vsel %vm1238, %v1222, %v1257
      %v1259 = vsel %vm1240, %v1223, %v1258
      %v1260 = vsel %vm1242, %v1224, %v1259
      %v1261 = vsel %vm1244, %v1225, %v1260
      %v1262 = vsel %vm1246, %v1226, %v1261
      %v1263 = vsel %vm1248, %v1227, %v1262
      %v1264 = vsel %vm1236, %v1229, %v1228
      %v1265 = vsel %vm1238, %v1230, %v1264
      %v1266 = vsel %vm1240, %v1231, %v1265
      %v1267 = vsel %vm1242, %v1232, %v1266
      %v1268 = vsel %vm1244, %v1233, %v1267
      %v1269 = vsel %vm1246, %v1234, %v1268
      %v1270 = vsel %vm1248, %v1235, %v1269
      %v1271 = vpack.c.b16 %v1249, %v1249
      %v1272 = vpack.c.b16 %v1256, %v1256
      %v1273 = vpack.c.b16 %v1263, %v1263
      %v1274 = vpack.c.b16 %v1270, %v1270
      %1279 = vst [vmem:[%s170] sm:$0xf] %v1271
      %1280 = vst [vmem:[%s170 + $0x4] sm:$0xf] %v1272
      %1281 = vst [vmem:[%s170 + $0x8] sm:$0xf] %v1273
      %1282 = vst [vmem:[%s170 + $0xc] sm:$0xf] %v1274
      %p1283 = scmp.lt.s32.totalorder %s14, 1
      %s1284 = scalar_select %p1283, %s14, 1
      %s1285 = smul.addr %s1284, 4
      %s1286 = smul.addr %s1285, 4
      %s1287 = scalar_lea.vmem %s3, %s1286
      // Predicated region
      $region33: #{recnet_v2_forward.1} parent=31 // pred_check
        %p1288 = pneg %p100
      $region34: #{recnet_v2_forward.1} parent=31 // pred_check_branch
        %1290 = sbr.rel (%p1288) target = $region36
      $region35: #{recnet_v2_forward.1} parent=31 // pred_region
        _
      $region36: #{recnet_v2_forward.1} parent=31 // pred_fallthru
        _
    $region32: #{recnet_v2_forward.1} parent=5 // pred_fallthru
      _
    %p1291 = scmp.le.s32.totalorder 2, %s9
    // Predicated region
    $region37: #{recnet_v2_forward.1} parent=5 // pred_check
      %p1292 = pneg %p1291
    $region38: #{recnet_v2_forward.1} parent=5 // pred_check_branch
      %1294 = sbr.rel (%p1292) target = $region40
    $region39: #{recnet_v2_forward.1} parent=5 // pred_region
      %s1295 = ssub.s32 %s9, 2
      // Predicated region
      $region41: #{recnet_v2_forward.1} parent=39 // pred_check
        %p1296 = pneg %p106
      $region42: #{recnet_v2_forward.1} parent=39 // pred_check_branch
        %1298 = sbr.rel (%p1296) target = $region44
      $region43: #{recnet_v2_forward.1} parent=39 // pred_region
        %p1299 = scmp.lt.s32.totalorder %s15, 1
        %s1300 = scalar_select %p1299, %s15, 1
        %s1301 = smul.addr %s1300, 4
        %s1302 = smul.addr %s1301, 4
        %s1303 = scalar_lea.vmem %s3, %s1302
      $region44: #{recnet_v2_forward.1} parent=39 // pred_fallthru
        _
    $region40: #{recnet_v2_forward.1} parent=5 // pred_fallthru
      _
  $region6: #{recnet_v2_forward.1} parent=0 // loop_footer
    %s13 = sadd.s32 1, %s9
  $region7: #{recnet_v2_forward.1} parent=0 // loop_footer_branch
    %8 = sbr.rel target = $region3
  $region8: #{recnet_v2_forward.1} parent=0 // loop_exit
    _

</llo_original>
